<compile_context>
chip_gen: v6e
topology: v6e:2x2x1
jax: 0.10.0
libtpu: 0.0.40
codegen_flags: <defaults>
</compile_context>

<pallas_src>
import jax
import jax.numpy as jnp
from jax.experimental import pallas as pl
from jax.experimental.pallas import tpu as pltpu


def quaternion_linear_kernel(x_ref, w_ref, b_ref, o_ref):
    """One batch-tile: out = x @ W + bias.

    x_ref : (bm, 4*in_f)        activation tile (bf16 by default)
    w_ref : (4*in_f, 4*out_f)   assembled quaternion weight (bf16 by default)
    b_ref : (1, 4*out_f)        bias, f32 (broadcast over batch)
    o_ref : (bm, 4*out_f)       output tile
    """
    acc = jnp.dot(x_ref[...], w_ref[...], preferred_element_type=jnp.float32)
    o_ref[...] = (acc + b_ref[...]).astype(o_ref.dtype)


def build_quaternion_weight(r_w, i_w, j_w, k_w):
    """Assemble the (4*in_f, 4*out_f) cat_kernels_4_quaternion matrix."""
    col_r = jnp.concatenate([r_w, -i_w, -j_w, -k_w], axis=0)
    col_i = jnp.concatenate([i_w,  r_w, -k_w,  j_w], axis=0)
    col_j = jnp.concatenate([j_w,  k_w,  r_w, -i_w], axis=0)
    col_k = jnp.concatenate([k_w, -j_w,  i_w,  r_w], axis=0)
    return jnp.concatenate([col_r, col_i, col_j, col_k], axis=1)


def quaternion_linear(x, r_w, i_w, j_w, k_w, bias=None, *, block_batch=None,
                      mxu_dtype=jnp.bfloat16):
    """out = x @ W_quaternion + bias via a single fused Pallas TPU matmul."""
    B, in_total = x.shape
    in_f, out_f = r_w.shape
    assert in_total == 4 * in_f
    out_total = 4 * out_f
    out_dtype = x.dtype

    # Assemble W once in the wrapper (grid-invariant -> DMA'd once, stays
    # resident in VMEM across grid steps).
    W = build_quaternion_weight(r_w, i_w, j_w, k_w).astype(mxu_dtype)
    x_mxu = x.astype(mxu_dtype)

    if bias is None:
        bias = jnp.zeros((out_total,), jnp.float32)
    # Keep bias in f32 so the epilogue add happens on the f32 accumulator.
    bias2d = bias.reshape(1, out_total).astype(jnp.float32)

    # Batch tile: big enough to fill the MXU M dim, multiple of 8 sublanes.
    if block_batch is None:
        bm = B
        for cand in (512, 256, 128, 64, 32, 16, 8):
            if B % cand == 0:
                bm = cand
                break
    else:
        bm = block_batch
    # TODO(synk): ragged batches unsupported; pad the batch externally if needed.
    assert B % bm == 0

    # Advisory cost estimate for XLA's scheduler.
    mxu_itemsize = jnp.dtype(mxu_dtype).itemsize
    out_itemsize = jnp.dtype(out_dtype).itemsize
    cost = pl.CostEstimate(
        flops=2 * B * in_total * out_total,
        transcendentals=0,
        bytes_accessed=(B * in_total * mxu_itemsize
                        + in_total * out_total * mxu_itemsize
                        + out_total * 4
                        + B * out_total * out_itemsize),
    )

    # VMEM budget: double-buffered x/out tiles + (at worst double-buffered)
    # W/bias. Clamp to 64 MiB so the same setting is legal on v7x.
    need = (2 * in_total * out_total * mxu_itemsize
            + 2 * out_total * 4
            + 2 * bm * in_total * mxu_itemsize
            + 2 * bm * out_total * out_itemsize)
    vmem_limit = int(min(max(2 * need, 32 * 1024 * 1024), 64 * 1024 * 1024))

    def make_call(single_buffer_constants):
        if single_buffer_constants:
            # Grid-invariant operands: one pipeline buffer is enough.
            w_spec = pl.BlockSpec((in_total, out_total), lambda b: (0, 0),
                                  pipeline_mode=pl.Buffered(1))
            b_spec = pl.BlockSpec((1, out_total), lambda b: (0, 0),
                                  pipeline_mode=pl.Buffered(1))
        else:
            w_spec = pl.BlockSpec((in_total, out_total), lambda b: (0, 0))
            b_spec = pl.BlockSpec((1, out_total), lambda b: (0, 0))
        return pl.pallas_call(
            quaternion_linear_kernel,
            out_shape=jax.ShapeDtypeStruct((B, out_total), out_dtype),
            grid_spec=pltpu.PrefetchScalarGridSpec(
                num_scalar_prefetch=0,
                grid=(B // bm,),
                in_specs=[
                    pl.BlockSpec((bm, in_total), lambda b: (b, 0)),   # x tile
                    w_spec,                                           # W (resident)
                    b_spec,                                           # bias (resident)
                ],
                out_specs=pl.BlockSpec((bm, out_total), lambda b: (b, 0)),
            ),
            compiler_params=pltpu.CompilerParams(
                dimension_semantics=("parallel",),
                vmem_limit_bytes=vmem_limit),
            cost_estimate=cost,
        )

    try:
        return make_call(True)(x_mxu, W, bias2d)
    except Exception:
        # pipeline_mode=pl.Buffered(1) unsupported in this jax build -> the
        # default double-buffered path (still correct, slightly more VMEM).
        return make_call(False)(x_mxu, W, bias2d)


if __name__ == "__main__":
    # Module config: in_features=256, out_features=256 -> in_f = out_f = 64,
    # so 4*out_f = 256 (lane-dense, multiple of 128). batch=256 with bm=128
    # gives a 2-program grid (both v7x TensorCores busy).
    in_features = 256
    out_features = 256
    in_f = in_features // 4
    out_f = out_features // 4
    batch = 256

    key = jax.random.PRNGKey(0)
    kx, kr, ki, kj, kk = jax.random.split(key, 5)

    # Deterministic glorot-scale init (stands in for quaternion_init; scale
    # s = 1/sqrt(2*(fan_in+fan_out)) as in the 'glorot' criterion).
    # TODO(synk): exact quaternion_init (chi-distributed modulus + random unit
    # imaginary axis) not reproduced; scale/shape semantics preserved.
    s = 1.0 / jnp.sqrt(2.0 * (in_f + out_f))
    r_w = jax.random.uniform(kr, (in_f, out_f), jnp.float32, -s, s)
    i_w = jax.random.uniform(ki, (in_f, out_f), jnp.float32, -s, s)
    j_w = jax.random.uniform(kj, (in_f, out_f), jnp.float32, -s, s)
    k_w = jax.random.uniform(kk, (in_f, out_f), jnp.float32, -s, s)
    bias = jnp.zeros((out_features,), jnp.float32)  # module fills bias with 0

    x = jax.random.normal(kx, (batch, in_features), jnp.float32)

    out = quaternion_linear(x, r_w, i_w, j_w, k_w, bias, block_batch=128)
    out = jax.block_until_ready(out)
    assert out.shape == (batch, out_features)

    # Reference with the same MXU dtype (bf16 operands, f32 accumulation).
    W_f32 = build_quaternion_weight(r_w, i_w, j_w, k_w)
    ref_bf16 = jnp.dot(x.astype(jnp.bfloat16), W_f32.astype(jnp.bfloat16),
                       preferred_element_type=jnp.float32) + bias
    assert jnp.allclose(out, ref_bf16, atol=2e-3, rtol=2e-3)

    # Loose sanity check against the full-precision reference.
    ref_f32 = x @ W_f32 + bias
    assert jnp.allclose(out, ref_f32, atol=5e-2, rtol=5e-2)

    print("KERNEL_OK")
</pallas_src>

<mosaic_0001>
module attributes {stable_mosaic.version = 11 : i64} {
  func.func @quaternion_linear_kernel(%arg0: i32, %arg1: memref<128x256xbf16, #tpu.memory_space<vmem>>, %arg2: memref<256x256xbf16, #tpu.memory_space<vmem>>, %arg3: memref<1x256xf32, #tpu.memory_space<vmem>>, %arg4: memref<128x256xf32, #tpu.memory_space<vmem>>) attributes {dimension_semantics = [#tpu.dimension_semantics<parallel>], iteration_bounds = array<i64: 2>, scalar_prefetch = 0 : i64, scratch_operands = 0 : i64, tpu.core_type = #tpu.core_type<tc>, window_params = [{transform_indices = @transform_0, window_bounds = array<i64: 128, 256>}, {pipeline_mode = #tpu.pipeline_mode<synchronous>, transform_indices = @transform_1, window_bounds = array<i64: 256, 256>}, {pipeline_mode = #tpu.pipeline_mode<synchronous>, transform_indices = @transform_2, window_bounds = array<i64: 1, 256>}, {transform_indices = @transform_3, window_bounds = array<i64: 128, 256>}]} {
    %c0 = arith.constant 0 : index
    %c0_0 = arith.constant 0 : index
    %0 = vector.load %arg1[%c0, %c0_0] : memref<128x256xbf16, #tpu.memory_space<vmem>>, vector<128x256xbf16>
    %c0_1 = arith.constant 0 : index
    %c0_2 = arith.constant 0 : index
    %1 = vector.load %arg2[%c0_1, %c0_2] : memref<256x256xbf16, #tpu.memory_space<vmem>>, vector<256x256xbf16>
    %cst = arith.constant dense<0.000000e+00> : vector<128x256xf32>
    %2 = tpu.matmul %0, %1, %cst {dimension_numbers = #tpu.dot_dimension_numbers<[1], [0], [0], [1], [0, 0, 1, 1], [], []>} : vector<128x256xbf16>, vector<256x256xbf16>, vector<128x256xf32> -> vector<128x256xf32>
    %c0_3 = arith.constant 0 : index
    %c0_4 = arith.constant 0 : index
    %3 = vector.load %arg3[%c0_3, %c0_4] : memref<1x256xf32, #tpu.memory_space<vmem>>, vector<1x256xf32>
    %4 = vector.broadcast %3 : vector<1x256xf32> to vector<128x256xf32>
    %5 = arith.addf %2, %4 : vector<128x256xf32>
    %c0_5 = arith.constant 0 : index
    %c0_6 = arith.constant 0 : index
    %6 = vector.load %arg4[%c0_5, %c0_6] : memref<128x256xf32, #tpu.memory_space<vmem>>, vector<128x256xf32>
    tpu.vector_store %arg4[%c0_5, %c0_6], %5 {strides = array<i32>} : memref<128x256xf32, #tpu.memory_space<vmem>>, vector<128x256xf32>,
    return
  }
  func.func @transform_0(%arg0: i32) -> (i32, i32) {
    %c0_i32 = arith.constant 0 : i32
    %c0_i32_0 = arith.constant 0 : i32
    return %arg0, %c0_i32 : i32, i32
  }
  func.func @transform_1(%arg0: i32) -> (i32, i32) {
    %c0_i32 = arith.constant 0 : i32
    %c0_i32_0 = arith.constant 0 : i32
    %c0_i32_1 = arith.constant 0 : i32
    return %c0_i32, %c0_i32_0 : i32, i32
  }
  func.func @transform_2(%arg0: i32) -> (i32, i32) {
    %c0_i32 = arith.constant 0 : i32
    %c0_i32_0 = arith.constant 0 : i32
    %c0_i32_1 = arith.constant 0 : i32
    return %c0_i32, %c0_i32_0 : i32, i32
  }
  func.func @transform_3(%arg0: i32) -> (i32, i32) {
    %c0_i32 = arith.constant 0 : i32
    %c0_i32_0 = arith.constant 0 : i32
    return %arg0, %c0_i32 : i32, i32
  }
}

module attributes {stable_mosaic.version = 11 : i64} {
  func.func @quaternion_linear_kernel(%arg0: i32, %arg1: memref<128x256xbf16, #tpu.memory_space<vmem>>, %arg2: memref<256x256xbf16, #tpu.memory_space<vmem>>, %arg3: memref<1x256xf32, #tpu.memory_space<vmem>>, %arg4: memref<128x256xf32, #tpu.memory_space<vmem>>) attributes {dimension_semantics = [#tpu.dimension_semantics<parallel>], iteration_bounds = array<i64: 2>, scalar_prefetch = 0 : i64, scratch_operands = 0 : i64, tpu.core_type = #tpu.core_type<tc>, window_params = [{transform_indices = @transform_0, window_bounds = array<i64: 128, 256>}, {pipeline_mode = #tpu.pipeline_mode<synchronous>, transform_indices = @transform_1, window_bounds = array<i64: 256, 256>}, {pipeline_mode = #tpu.pipeline_mode<synchronous>, transform_indices = @transform_2, window_bounds = array<i64: 1, 256>}, {transform_indices = @transform_3, window_bounds = array<i64: 128, 256>}]} {
    %c0 = arith.constant 0 : index
    %c0_0 = arith.constant 0 : index
    %0 = vector.load %arg1[%c0, %c0_0] : memref<128x256xbf16, #tpu.memory_space<vmem>>, vector<128x256xbf16>
    %c0_1 = arith.constant 0 : index
    %c0_2 = arith.constant 0 : index
    %1 = vector.load %arg2[%c0_1, %c0_2] : memref<256x256xbf16, #tpu.memory_space<vmem>>, vector<256x256xbf16>
    %cst = arith.constant dense<0.000000e+00> : vector<128x256xf32>
    %2 = tpu.matmul %0, %1, %cst {dimension_numbers = #tpu.dot_dimension_numbers<[1], [0], [0], [1], [0, 0, 1, 1], [], []>} : vector<128x256xbf16>, vector<256x256xbf16>, vector<128x256xf32> -> vector<128x256xf32>
    %c0_3 = arith.constant 0 : index
    %c0_4 = arith.constant 0 : index
    %3 = vector.load %arg3[%c0_3, %c0_4] : memref<1x256xf32, #tpu.memory_space<vmem>>, vector<1x256xf32>
    %4 = vector.broadcast %3 : vector<1x256xf32> to vector<128x256xf32>
    %5 = arith.addf %2, %4 : vector<128x256xf32>
    %c0_5 = arith.constant 0 : index
    %c0_6 = arith.constant 0 : index
    %6 = vector.load %arg4[%c0_5, %c0_6] : memref<128x256xf32, #tpu.memory_space<vmem>>, vector<128x256xf32>
    tpu.vector_store %arg4[%c0_5, %c0_6], %5 {strides = array<i32>} : memref<128x256xf32, #tpu.memory_space<vmem>>, vector<128x256xf32>,
    return
  }
  func.func @transform_0(%arg0: i32) -> (i32, i32) {
    %c0_i32 = arith.constant 0 : i32
    %c0_i32_0 = arith.constant 0 : i32
    return %arg0, %c0_i32 : i32, i32
  }
  func.func @transform_1(%arg0: i32) -> (i32, i32) {
    %c0_i32 = arith.constant 0 : i32
    %c0_i32_0 = arith.constant 0 : i32
    %c0_i32_1 = arith.constant 0 : i32
    return %c0_i32, %c0_i32_0 : i32, i32
  }
  func.func @transform_2(%arg0: i32) -> (i32, i32) {
    %c0_i32 = arith.constant 0 : i32
    %c0_i32_0 = arith.constant 0 : i32
    %c0_i32_1 = arith.constant 0 : i32
    return %c0_i32, %c0_i32_0 : i32, i32
  }
  func.func @transform_3(%arg0: i32) -> (i32, i32) {
    %c0_i32 = arith.constant 0 : i32
    %c0_i32_0 = arith.constant 0 : i32
    return %arg0, %c0_i32 : i32, i32
  }
}

</mosaic_0001>

<llo_original>
// kernel: tpu_custom_call.1
$region0: #{tpu_custom_call.1}
  #allocation0 [shape = 'u32[]', space=smem, size = 0x4, offset = 0x4, fixed_abs, tag = 'smem constant byte address 0x4 - core index']
  #allocation1 [shape = 'u32[144,128]{1,0:T(1,128)}', space=vmem, size = 0x12000, scoped, tag = 'internal scratch']
  %s0 = inlined_call_operand.hbm [shape: bf16[256,256], index: 0, kind: input, shape index: {}]
  %s1 = inlined_call_operand.hbm [shape: bf16[256,256], index: 1, kind: input, shape index: {}]
  %s2 = inlined_call_operand.vmem [shape: f32[1,256], index: 2, kind: input, shape index: {}]
  %s3 = inlined_call_operand.hbm [shape: f32[256,256], index: 3, kind: output, shape index: {}]
  %s4 = sld [smem:[#allocation0]]
  $region53: #{tpu_custom_call.1} parent=0
    _
  %s6 = ssub.s32 1, %s4
  %s7 = scalar_select 0, %s6, %s4
  $region1: #{tpu_custom_call.1} parent=0
    #allocation2 [shape = 'u8[131072]{0}', space=vmem, size = 0x20000, scoped, tag = 'input window, operand 0']
    #allocation3 [shape = 's32[2]{0}', space=sflag, size = 0x8, scoped, tag = 'scoped memory for tpu_custom_call.1']
    #allocation4 [shape = 's32[2]{0}', space=sflag, size = 0x8, scoped, tag = 'scoped memory for tpu_custom_call.1']
    #allocation5 [shape = 'u8[131072]{0}', space=vmem, size = 0x20000, scoped, tag = 'input window, operand 1, single buffered']
    #allocation6 [shape = 's32[1]{0}', space=sflag, size = 0x4, scoped, tag = 'scoped memory for tpu_custom_call.1']
    #allocation7 [shape = 'u8[262144]{0}', space=vmem, size = 0x40000, scoped, tag = 'output window, operand 0']
    %8 = vsyncpa [#allocation3], 0
    %s9 = scalar_lea.sflag [#allocation3], 1
    %10 = vsyncpa %s9, 0
    %11 = vsyncpa [#allocation6], 0
    %12 = vsyncpa [#allocation4], 0
    %s13 = scalar_lea.sflag [#allocation4], 1
    %14 = vsyncpa %s13, 0
    loop: start=0, step=1, limit=4
    $region2: #{tpu_custom_call.1} parent=1 // loop_pre_header
      _
    $region3: #{tpu_custom_call.1} parent=1 // loop_header
      %s16 = sphi 0, %s20
      %p17 = scmp.ge.s32.totalorder %s16, 4
      %s26 = sphi 0, %s28
      %s29 = sphi 0, %s26
      %s30 = sphi 0, %s29
      %s46 = sphi 0, %s30
      %s50 = sphi 0, %s50
      %s52 = sphi 0, %s50
      %s53 = sphi 0, %s52
      %s67 = sphi 0, %s53
      %s71 = sphi 0, %s71
      %s73 = sphi 0, %s71
      %s74 = sphi 0, %s73
      %s88 = sphi 0, %s74
      %s94 = sphi 0, %s96
      %s97 = sphi 0, %s94
      %s98 = sphi 0, %s97
      %s114 = sphi 0, %s98
    $region4: #{tpu_custom_call.1} parent=1 // loop_header_branch
      %19 = sbr.rel (%p17) target = $region8
    $region5: #{tpu_custom_call.1} parent=1 // loop_body
      %s21 = ssub.s32 %s16, 1
      %s22 = ssub.s32 %s16, 2
      %s23 = sadd.s32 %s16, 1
      %s24 = ssub.s32 %s16, %s23
      %p25 = scmp.eq.s32.totalorder %s24, 0
      %s27 = sadd.s32 %s26, 1
      %s28 = scalar_select %p25, %s26, %s27
      %p31 = pneg %p25
      %p32 = scmp.eq.s32.totalorder %s16, 1
      %p33 = por %p31, %p32
      %p34 = scmp.ne.s32.totalorder %s26, %s29
      %p35 = scmp.eq.s32.totalorder %s16, 0
      %p36 = por %p34, %p35
      %p37 = scmp.ne.s32.totalorder %s26, %s29
      %p38 = scmp.eq.s32.totalorder %s21, 1
      %p39 = por %p37, %p38
      %p40 = scmp.ne.s32.totalorder %s29, %s30
      %p41 = scmp.eq.s32.totalorder %s21, 0
      %p42 = por %p40, %p41
      %p43 = scmp.ne.s32.totalorder %s29, %s30
      %p44 = scmp.eq.s32.totalorder %s22, 1
      %p45 = por %p43, %p44
      %p47 = scmp.ne.s32.totalorder %s30, %s46
      %p48 = scmp.eq.s32.totalorder %s22, 0
      %p49 = por %p47, %p48
      %s51 = sadd.s32 %s50, 1
      %p54 = scmp.eq.s32.totalorder %s16, 1
      %p55 = scmp.ne.s32.totalorder %s50, %s52
      %p56 = scmp.eq.s32.totalorder %s16, 0
      %p57 = por %p55, %p56
      %p58 = scmp.ne.s32.totalorder %s50, %s52
      %p59 = scmp.eq.s32.totalorder %s21, 1
      %p60 = por %p58, %p59
      %p61 = scmp.ne.s32.totalorder %s52, %s53
      %p62 = scmp.eq.s32.totalorder %s21, 0
      %p63 = por %p61, %p62
      %p64 = scmp.ne.s32.totalorder %s52, %s53
      %p65 = scmp.eq.s32.totalorder %s22, 1
      %p66 = por %p64, %p65
      %p68 = scmp.ne.s32.totalorder %s53, %s67
      %p69 = scmp.eq.s32.totalorder %s22, 0
      %p70 = por %p68, %p69
      %s72 = sadd.s32 %s71, 1
      %p75 = scmp.eq.s32.totalorder %s16, 1
      %p76 = scmp.ne.s32.totalorder %s71, %s73
      %p77 = scmp.eq.s32.totalorder %s16, 0
      %p78 = por %p76, %p77
      %p79 = scmp.ne.s32.totalorder %s71, %s73
      %p80 = scmp.eq.s32.totalorder %s21, 1
      %p81 = por %p79, %p80
      %p82 = scmp.ne.s32.totalorder %s73, %s74
      %p83 = scmp.eq.s32.totalorder %s21, 0
      %p84 = por %p82, %p83
      %p85 = scmp.ne.s32.totalorder %s73, %s74
      %p86 = scmp.eq.s32.totalorder %s22, 1
      %p87 = por %p85, %p86
      %p89 = scmp.ne.s32.totalorder %s74, %s88
      %p90 = scmp.eq.s32.totalorder %s22, 0
      %p91 = por %p89, %p90
      %s92 = ssub.s32 %s16, %s23
      %p93 = scmp.eq.s32.totalorder %s92, 0
      %s95 = sadd.s32 %s94, 1
      %s96 = scalar_select %p93, %s94, %s95
      %p99 = pneg %p93
      %p100 = scmp.eq.s32.totalorder %s16, 1
      %p101 = por %p99, %p100
      %p102 = scmp.ne.s32.totalorder %s94, %s97
      %p103 = scmp.eq.s32.totalorder %s16, 0
      %p104 = por %p102, %p103
      %p105 = scmp.ne.s32.totalorder %s94, %s97
      %p106 = scmp.eq.s32.totalorder %s21, 1
      %p107 = por %p105, %p106
      %p108 = scmp.ne.s32.totalorder %s97, %s98
      %p109 = scmp.eq.s32.totalorder %s21, 0
      %p110 = por %p108, %p109
      %p111 = scmp.ne.s32.totalorder %s97, %s98
      %p112 = scmp.eq.s32.totalorder %s22, 1
      %p113 = por %p111, %p112
      %p115 = scmp.ne.s32.totalorder %s98, %s114
      %p116 = scmp.eq.s32.totalorder %s22, 0
      %p117 = por %p115, %p116
      %p118 = scmp.le.s32.totalorder 1, %s16
      %p119 = scmp.lt.s32.totalorder %s16, 3
      %p120 = pnand %p118, %p119
      %p121 = pneg %p120
      // Predicated region
      $region9: #{tpu_custom_call.1} parent=5 // pred_check
        _
      $region10: #{tpu_custom_call.1} parent=5 // pred_check_branch
        %123 = sbr.rel (%p120) target = $region12
      $region11: #{tpu_custom_call.1} parent=5 // pred_region
        %s124 = ssub.s32 %s16, 1
        // Predicated region
        $region13: #{tpu_custom_call.1} parent=11 // pred_check
          %p125 = pneg %p63
        $region14: #{tpu_custom_call.1} parent=11 // pred_check_branch
          %127 = sbr.rel (%p125) target = $region16
        $region15: #{tpu_custom_call.1} parent=11 // pred_region
          %s129 = ssub.s32 4096, 4096
          %130 = vsyncadd [#allocation6], %s129
          %s131 = sshll.u32 [#allocation5], 4
          %s132 = int_to_ptr.vmem [resolvable:$true] %s131
          %137 = dma.hbm_to_vmem [thread:$0]  %s1, 4096, %s132, [#allocation6], 128, 128, 8
        $region16: #{tpu_custom_call.1} parent=11 // pred_fallthru
          _
        // Predicated region
        $region17: #{tpu_custom_call.1} parent=11 // pred_check
          %p138 = pneg %p84
        $region18: #{tpu_custom_call.1} parent=11 // pred_check_branch
          %140 = sbr.rel (%p138) target = $region20
        $region19: #{tpu_custom_call.1} parent=11 // pred_region
          _
        $region20: #{tpu_custom_call.1} parent=11 // pred_fallthru
          _
      $region12: #{tpu_custom_call.1} parent=5 // pred_fallthru
        _
      %p141 = scmp.lt.s32.totalorder %s16, 2
      // Predicated region
      $region21: #{tpu_custom_call.1} parent=5 // pred_check
        %p142 = pneg %p141
      $region22: #{tpu_custom_call.1} parent=5 // pred_check_branch
        %144 = sbr.rel (%p142) target = $region24
      $region23: #{tpu_custom_call.1} parent=5 // pred_region
        // Predicated region
        $region25: #{tpu_custom_call.1} parent=23 // pred_check
          %p145 = pneg %p36
        $region26: #{tpu_custom_call.1} parent=23 // pred_check_branch
          %147 = sbr.rel (%p145) target = $region28
        $region27: #{tpu_custom_call.1} parent=23 // pred_region
          %s148 = sand.u32 %s26, 1
          %s149 = scalar_lea.sflag [#allocation3], %s148
          %s150 = sand.u32 %s26, 1
          %s151 = smul.addr %s150, 128
          %s152 = scalar_lea.vmem [#allocation2], %s151
          %s153 = smul.u32 16, %s16
          %s155 = ssub.s32 2048, 2048
          %156 = vsyncadd %s149, %s155
          %s157 = smul.addr %s153, 2
          %s158 = smul.addr %s157, 64
          %s159 = scalar_lea.hbm %s0, %s158
          %s160 = sshll.u32 %s152, 4
          %s161 = int_to_ptr.vmem [resolvable:$true] %s160
          %166 = dma.hbm_to_vmem [thread:$0]  %s159, 2048, %s161, %s149, 128, 128, 8
        $region28: #{tpu_custom_call.1} parent=23 // pred_fallthru
          _
      $region24: #{tpu_custom_call.1} parent=5 // pred_fallthru
        _
      %p167 = scmp.le.s32.totalorder 1, %s16
      %p168 = scmp.lt.s32.totalorder %s16, 3
      %p169 = pnand %p167, %p168
      %p170 = pneg %p169
      // Predicated region
      $region29: #{tpu_custom_call.1} parent=5 // pred_check
        _
      $region30: #{tpu_custom_call.1} parent=5 // pred_check_branch
        %172 = sbr.rel (%p169) target = $region32
      $region31: #{tpu_custom_call.1} parent=5 // pred_region
        %s173 = ssub.s32 %s16, 1
        %s174 = sand.u32 %s29, 1
        %s175 = scalar_lea.sflag [#allocation3], %s174
        %s176 = sand.u32 %s29, 1
        %s177 = smul.addr %s176, 128
        %s178 = scalar_lea.vmem [#allocation2], %s177
        // Predicated region
        $region33: #{tpu_custom_call.1} parent=31 // pred_check
          %p179 = pneg %p42
        $region34: #{tpu_custom_call.1} parent=31 // pred_check_branch
          %181 = sbr.rel (%p179) target = $region36
        $region35: #{tpu_custom_call.1} parent=31 // pred_region
          %182 = dma.done %s175, 2048
        $region36: #{tpu_custom_call.1} parent=31 // pred_fallthru
          _
        // Predicated region
        $region37: #{tpu_custom_call.1} parent=31 // pred_check
          %p183 = pneg %p63
        $region38: #{tpu_custom_call.1} parent=31 // pred_check_branch
          %185 = sbr.rel (%p183) target = $region40
        $region39: #{tpu_custom_call.1} parent=31 // pred_region
          %186 = dma.done [#allocation6], 4096
        $region40: #{tpu_custom_call.1} parent=31 // pred_fallthru
          _
        %s187 = sand.u32 %s29, 1
        %s188 = scalar_lea.sflag [#allocation3], %s187
        %s189 = sand.u32 %s29, 1
        %s190 = smul.addr %s189, 128
        %s191 = scalar_lea.vmem [#allocation2], %s190
        %p192 = pneg %p42
        %p193 = pneg %p39
        %p194 = pneg %p63
        %p195 = pneg %p60
        %p196 = pneg %p84
        %p197 = pneg %p81
        %p198 = pneg %p110
        %p199 = pneg %p107
        %s200 = sand.u32 %s97, 1
        %s201 = scalar_lea.sflag [#allocation4], %s200
        %s202 = sand.u32 %s97, 1
        %s203 = smul.addr %s202, 256
        %s204 = scalar_lea.vmem [#allocation7], %s203
        %s205 = smul.u32 16, %s21
        %s206 = smul.u32 16, %s21
        %v207 = vld [vmem:[%s178] sm:$0xff]
        %v208 = vld [vmem:[%s178 + $0x8] sm:$0xff]
        %v209 = vld [vmem:[%s178 + $0x10] sm:$0xff]
        %v210 = vld [vmem:[%s178 + $0x18] sm:$0xff]
        %v211 = vld [vmem:[%s178 + $0x20] sm:$0xff]
        %v212 = vld [vmem:[%s178 + $0x28] sm:$0xff]
        %v213 = vld [vmem:[%s178 + $0x30] sm:$0xff]
        %v214 = vld [vmem:[%s178 + $0x38] sm:$0xff]
        %v215 = vld [vmem:[%s178 + $0x40] sm:$0xff]
        %v216 = vld [vmem:[%s178 + $0x48] sm:$0xff]
        %v217 = vld [vmem:[%s178 + $0x50] sm:$0xff]
        %v218 = vld [vmem:[%s178 + $0x58] sm:$0xff]
        %v219 = vld [vmem:[%s178 + $0x60] sm:$0xff]
        %v220 = vld [vmem:[%s178 + $0x68] sm:$0xff]
        %v221 = vld [vmem:[%s178 + $0x70] sm:$0xff]
        %v222 = vld [vmem:[%s178 + $0x78] sm:$0xff]
        %v223 = vld [vmem:[#allocation5] sm:$0xff]
        %v224 = vld [vmem:[#allocation5 + $0x8] sm:$0xff]
        %v225 = vld [vmem:[#allocation5 + $0x10] sm:$0xff]
        %v226 = vld [vmem:[#allocation5 + $0x18] sm:$0xff]
        %v227 = vld [vmem:[#allocation5 + $0x20] sm:$0xff]
        %v228 = vld [vmem:[#allocation5 + $0x28] sm:$0xff]
        %v229 = vld [vmem:[#allocation5 + $0x30] sm:$0xff]
        %v230 = vld [vmem:[#allocation5 + $0x38] sm:$0xff]
        %v231 = vld [vmem:[#allocation5 + $0x40] sm:$0xff]
        %v232 = vld [vmem:[#allocation5 + $0x48] sm:$0xff]
        %v233 = vld [vmem:[#allocation5 + $0x50] sm:$0xff]
        %v234 = vld [vmem:[#allocation5 + $0x58] sm:$0xff]
        %v235 = vld [vmem:[#allocation5 + $0x60] sm:$0xff]
        %v236 = vld [vmem:[#allocation5 + $0x68] sm:$0xff]
        %v237 = vld [vmem:[#allocation5 + $0x70] sm:$0xff]
        %v238 = vld [vmem:[#allocation5 + $0x78] sm:$0xff]
        %v239 = vld [vmem:[#allocation5 + $0x80] sm:$0xff]
        %v240 = vld [vmem:[#allocation5 + $0x88] sm:$0xff]
        %v241 = vld [vmem:[#allocation5 + $0x90] sm:$0xff]
        %v242 = vld [vmem:[#allocation5 + $0x98] sm:$0xff]
        %v243 = vld [vmem:[#allocation5 + $0xa0] sm:$0xff]
        %v244 = vld [vmem:[#allocation5 + $0xa8] sm:$0xff]
        %v245 = vld [vmem:[#allocation5 + $0xb0] sm:$0xff]
        %v246 = vld [vmem:[#allocation5 + $0xb8] sm:$0xff]
        %v247 = vld [vmem:[#allocation5 + $0xc0] sm:$0xff]
        %v248 = vld [vmem:[#allocation5 + $0xc8] sm:$0xff]
        %v249 = vld [vmem:[#allocation5 + $0xd0] sm:$0xff]
        %v250 = vld [vmem:[#allocation5 + $0xd8] sm:$0xff]
        %v251 = vld [vmem:[#allocation5 + $0xe0] sm:$0xff]
        %v252 = vld [vmem:[#allocation5 + $0xe8] sm:$0xff]
        %v253 = vld [vmem:[#allocation5 + $0xf0] sm:$0xff]
        %v254 = vld [vmem:[#allocation5 + $0xf8] sm:$0xff]
        %v255 = vld [vmem:[%s2] sm:$0x3]
        %v257 = vlaneseq
        %v258 = vshrl.u32 %v257, 7
        %v259 = vsub.s32 0, %v258
        %v260 = vrot.slane %v255, %v259
        %v261 = vlaneseq
        %v262 = vshrl.u32 %v261, 7
        %v263 = vsub.s32 1, %v262
        %v264 = vrot.slane %v255, %v263
        %v283 = vunpack.c.l.b16 %v207
        %v284 = vunpack.c.h.b16 %v207
        %v285 = vunpack.c.l.b16 %v208
        %v286 = vunpack.c.h.b16 %v208
        %v287 = vunpack.c.l.b16 %v209
        %v288 = vunpack.c.h.b16 %v209
        %v289 = vunpack.c.l.b16 %v210
        %v290 = vunpack.c.h.b16 %v210
        %v291 = vunpack.c.l.b16 %v211
        %v292 = vunpack.c.h.b16 %v211
        %v293 = vunpack.c.l.b16 %v212
        %v294 = vunpack.c.h.b16 %v212
        %v295 = vunpack.c.l.b16 %v213
        %v296 = vunpack.c.h.b16 %v213
        %v297 = vunpack.c.l.b16 %v214
        %v298 = vunpack.c.h.b16 %v214
        %v299 = vunpack.c.l.b16 %v215
        %v300 = vunpack.c.h.b16 %v215
        %v301 = vunpack.c.l.b16 %v216
        %v302 = vunpack.c.h.b16 %v216
        %v303 = vunpack.c.l.b16 %v217
        %v304 = vunpack.c.h.b16 %v217
        %v305 = vunpack.c.l.b16 %v218
        %v306 = vunpack.c.h.b16 %v218
        %v307 = vunpack.c.l.b16 %v219
        %v308 = vunpack.c.h.b16 %v219
        %v309 = vunpack.c.l.b16 %v220
        %v310 = vunpack.c.h.b16 %v220
        %v311 = vunpack.c.l.b16 %v221
        %v312 = vunpack.c.h.b16 %v221
        %v313 = vunpack.c.l.b16 %v222
        %v314 = vunpack.c.h.b16 %v222
        %v315 = vpack.c.b16 %v285, %v283
        %v316 = vpack.c.b16 %v286, %v284
        %v317 = vpack.c.b16 %v289, %v287
        %v318 = vpack.c.b16 %v290, %v288
        %v319 = vpack.c.b16 %v293, %v291
        %v320 = vpack.c.b16 %v294, %v292
        %v321 = vpack.c.b16 %v297, %v295
        %v322 = vpack.c.b16 %v298, %v296
        %v323 = vpack.c.b16 %v301, %v299
        %v324 = vpack.c.b16 %v302, %v300
        %v325 = vpack.c.b16 %v305, %v303
        %v326 = vpack.c.b16 %v306, %v304
        %v327 = vpack.c.b16 %v309, %v307
        %v328 = vpack.c.b16 %v310, %v308
        %v329 = vpack.c.b16 %v313, %v311
        %v330 = vpack.c.b16 %v314, %v312
        %v379 = vunpack.c.l.b16 %v223
        %v380 = vunpack.c.h.b16 %v223
        %v381 = vunpack.c.l.b16 %v224
        %v382 = vunpack.c.h.b16 %v224
        %v383 = vunpack.c.l.b16 %v225
        %v384 = vunpack.c.h.b16 %v225
        %v385 = vunpack.c.l.b16 %v226
        %v386 = vunpack.c.h.b16 %v226
        %v387 = vunpack.c.l.b16 %v227
        %v388 = vunpack.c.h.b16 %v227
        %v389 = vunpack.c.l.b16 %v228
        %v390 = vunpack.c.h.b16 %v228
        %v391 = vunpack.c.l.b16 %v229
        %v392 = vunpack.c.h.b16 %v229
        %v393 = vunpack.c.l.b16 %v230
        %v394 = vunpack.c.h.b16 %v230
        %v395 = vunpack.c.l.b16 %v231
        %v396 = vunpack.c.h.b16 %v231
        %v397 = vunpack.c.l.b16 %v232
        %v398 = vunpack.c.h.b16 %v232
        %v399 = vunpack.c.l.b16 %v233
        %v400 = vunpack.c.h.b16 %v233
        %v401 = vunpack.c.l.b16 %v234
        %v402 = vunpack.c.h.b16 %v234
        %v403 = vunpack.c.l.b16 %v235
        %v404 = vunpack.c.h.b16 %v235
        %v405 = vunpack.c.l.b16 %v236
        %v406 = vunpack.c.h.b16 %v236
        %v407 = vunpack.c.l.b16 %v237
        %v408 = vunpack.c.h.b16 %v237
        %v409 = vunpack.c.l.b16 %v238
        %v410 = vunpack.c.h.b16 %v238
        %v411 = vunpack.c.l.b16 %v239
        %v412 = vunpack.c.h.b16 %v239
        %v413 = vunpack.c.l.b16 %v240
        %v414 = vunpack.c.h.b16 %v240
        %v415 = vunpack.c.l.b16 %v241
        %v416 = vunpack.c.h.b16 %v241
        %v417 = vunpack.c.l.b16 %v242
        %v418 = vunpack.c.h.b16 %v242
        %v419 = vunpack.c.l.b16 %v243
        %v420 = vunpack.c.h.b16 %v243
        %v421 = vunpack.c.l.b16 %v244
        %v422 = vunpack.c.h.b16 %v244
        %v423 = vunpack.c.l.b16 %v245
        %v424 = vunpack.c.h.b16 %v245
        %v425 = vunpack.c.l.b16 %v246
        %v426 = vunpack.c.h.b16 %v246
        %v427 = vunpack.c.l.b16 %v247
        %v428 = vunpack.c.h.b16 %v247
        %v429 = vunpack.c.l.b16 %v248
        %v430 = vunpack.c.h.b16 %v248
        %v431 = vunpack.c.l.b16 %v249
        %v432 = vunpack.c.h.b16 %v249
        %v433 = vunpack.c.l.b16 %v250
        %v434 = vunpack.c.h.b16 %v250
        %v435 = vunpack.c.l.b16 %v251
        %v436 = vunpack.c.h.b16 %v251
        %v437 = vunpack.c.l.b16 %v252
        %v438 = vunpack.c.h.b16 %v252
        %v439 = vunpack.c.l.b16 %v253
        %v440 = vunpack.c.h.b16 %v253
        %v441 = vunpack.c.l.b16 %v254
        %v442 = vunpack.c.h.b16 %v254
        %v443 = vpack.c.b16 %v381, %v379
        %v444 = vpack.c.b16 %v382, %v380
        %v445 = vpack.c.b16 %v385, %v383
        %v446 = vpack.c.b16 %v386, %v384
        %v447 = vpack.c.b16 %v389, %v387
        %v448 = vpack.c.b16 %v390, %v388
        %v449 = vpack.c.b16 %v393, %v391
        %v450 = vpack.c.b16 %v394, %v392
        %v451 = vpack.c.b16 %v397, %v395
        %v452 = vpack.c.b16 %v398, %v396
        %v453 = vpack.c.b16 %v401, %v399
        %v454 = vpack.c.b16 %v402, %v400
        %v455 = vpack.c.b16 %v405, %v403
        %v456 = vpack.c.b16 %v406, %v404
        %v457 = vpack.c.b16 %v409, %v407
        %v458 = vpack.c.b16 %v410, %v408
        %v459 = vpack.c.b16 %v413, %v411
        %v460 = vpack.c.b16 %v414, %v412
        %v461 = vpack.c.b16 %v417, %v415
        %v462 = vpack.c.b16 %v418, %v416
        %v463 = vpack.c.b16 %v421, %v419
        %v464 = vpack.c.b16 %v422, %v420
        %v465 = vpack.c.b16 %v425, %v423
        %v466 = vpack.c.b16 %v426, %v424
        %v467 = vpack.c.b16 %v429, %v427
        %v468 = vpack.c.b16 %v430, %v428
        %v469 = vpack.c.b16 %v433, %v431
        %v470 = vpack.c.b16 %v434, %v432
        %v471 = vpack.c.b16 %v437, %v435
        %v472 = vpack.c.b16 %v438, %v436
        %v473 = vpack.c.b16 %v441, %v439
        %v474 = vpack.c.b16 %v442, %v440
        %507 = vmatprep.subr.bf16.mxu0 %v458
        %508 = vmatpush1.bf16.msra.mxu0 %v457
        %509 = vmatprep.subr.bf16.mxu0 %v456
        %510 = vmatpush1.bf16.msra.mxu0 %v455
        %511 = vmatprep.subr.bf16.mxu0 %v454
        %512 = vmatpush1.bf16.msra.mxu0 %v453
        %513 = vmatprep.subr.bf16.mxu0 %v452
        %514 = vmatpush1.bf16.msra.mxu0 %v451
        %515 = vmatprep.subr.bf16.mxu0 %v450
        %516 = vmatpush1.bf16.msra.mxu0 %v449
        %517 = vmatprep.subr.bf16.mxu0 %v448
        %518 = vmatpush1.bf16.msra.mxu0 %v447
        %519 = vmatprep.subr.bf16.mxu0 %v446
        %520 = vmatpush1.bf16.msra.mxu0 %v445
        %521 = vmatprep.subr.bf16.mxu0 %v444
        %522 = vmatpush1.bf16.msra.mxu0 %v443
        %523 = vmatprep.subr.bf16.mxu0 %v474
        %524 = vmatpush2.bf16.msra.mxu0 %v473
        %525 = vmatprep.subr.bf16.mxu0 %v472
        %526 = vmatpush2.bf16.msra.mxu0 %v471
        %527 = vmatprep.subr.bf16.mxu0 %v470
        %528 = vmatpush2.bf16.msra.mxu0 %v469
        %529 = vmatprep.subr.bf16.mxu0 %v468
        %530 = vmatpush2.bf16.msra.mxu0 %v467
        %531 = vmatprep.subr.bf16.mxu0 %v466
        %532 = vmatpush2.bf16.msra.mxu0 %v465
        %533 = vmatprep.subr.bf16.mxu0 %v464
        %534 = vmatpush2.bf16.msra.mxu0 %v463
        %535 = vmatprep.subr.bf16.mxu0 %v462
        %536 = vmatpush2.bf16.msra.mxu0 %v461
        %537 = vmatprep.subr.bf16.mxu0 %v460
        %538 = vmatpush2.bf16.msra.mxu0 %v459
        %539 = vmatprep.mubr.bf16.mxu0 %v316
        %540 = vmatmul.mubr.bf16.gmra.mxu0 %v315
        %v541 = vpop.f32.mrf.mxu0
        %v542 = vadd.f32 %v260, %v541
        %v543 = vpop.f32.mrf.mxu0
        %v544 = vadd.f32 %v264, %v543
        %v545 = vpop.f32.mrf.mxu0
        %v546 = vadd.f32 %v260, %v545
        %v547 = vpop.f32.mrf.mxu0
        %v548 = vadd.f32 %v264, %v547
        %549 = vmatprep.mubr.bf16.mxu0 %v318
        %550 = vmatmul.mubr.bf16.gmra.mxu0 %v317
        %v551 = vpop.f32.mrf.mxu0
        %v552 = vadd.f32 %v260, %v551
        %v553 = vpop.f32.mrf.mxu0
        %v554 = vadd.f32 %v264, %v553
        %v555 = vpop.f32.mrf.mxu0
        %v556 = vadd.f32 %v260, %v555
        %v557 = vpop.f32.mrf.mxu0
        %v558 = vadd.f32 %v264, %v557
        %559 = vmatprep.mubr.bf16.mxu0 %v320
        %560 = vmatmul.mubr.bf16.gmra.mxu0 %v319
        %v561 = vpop.f32.mrf.mxu0
        %v562 = vadd.f32 %v260, %v561
        %v563 = vpop.f32.mrf.mxu0
        %v564 = vadd.f32 %v264, %v563
        %v565 = vpop.f32.mrf.mxu0
        %v566 = vadd.f32 %v260, %v565
        %v567 = vpop.f32.mrf.mxu0
        %v568 = vadd.f32 %v264, %v567
        %569 = vmatprep.mubr.bf16.mxu0 %v322
        %570 = vmatmul.mubr.bf16.gmra.mxu0 %v321
        %v571 = vpop.f32.mrf.mxu0
        %v572 = vadd.f32 %v260, %v571
        %v573 = vpop.f32.mrf.mxu0
        %v574 = vadd.f32 %v264, %v573
        %v575 = vpop.f32.mrf.mxu0
        %v576 = vadd.f32 %v260, %v575
        %v577 = vpop.f32.mrf.mxu0
        %v578 = vadd.f32 %v264, %v577
        %579 = vmatprep.mubr.bf16.mxu0 %v324
        %580 = vmatmul.mubr.bf16.gmra.mxu0 %v323
        %v581 = vpop.f32.mrf.mxu0
        %v582 = vadd.f32 %v260, %v581
        %v583 = vpop.f32.mrf.mxu0
        %v584 = vadd.f32 %v264, %v583
        %v585 = vpop.f32.mrf.mxu0
        %v586 = vadd.f32 %v260, %v585
        %v587 = vpop.f32.mrf.mxu0
        %v588 = vadd.f32 %v264, %v587
        %589 = vmatprep.mubr.bf16.mxu0 %v326
        %590 = vmatmul.mubr.bf16.gmra.mxu0 %v325
        %v591 = vpop.f32.mrf.mxu0
        %v592 = vadd.f32 %v260, %v591
        %v593 = vpop.f32.mrf.mxu0
        %v594 = vadd.f32 %v264, %v593
        %v595 = vpop.f32.mrf.mxu0
        %v596 = vadd.f32 %v260, %v595
        %v597 = vpop.f32.mrf.mxu0
        %v598 = vadd.f32 %v264, %v597
        %599 = vmatprep.mubr.bf16.mxu0 %v328
        %600 = vmatmul.mubr.bf16.gmra.mxu0 %v327
        %v601 = vpop.f32.mrf.mxu0
        %v602 = vadd.f32 %v260, %v601
        %v603 = vpop.f32.mrf.mxu0
        %v604 = vadd.f32 %v264, %v603
        %v605 = vpop.f32.mrf.mxu0
        %v606 = vadd.f32 %v260, %v605
        %v607 = vpop.f32.mrf.mxu0
        %v608 = vadd.f32 %v264, %v607
        %609 = vmatprep.mubr.bf16.mxu0 %v330
        %610 = vmatmul.mubr.bf16.gmra.mxu0 %v329
        %v611 = vpop.f32.mrf.mxu0
        %v612 = vadd.f32 %v260, %v611
        %v613 = vpop.f32.mrf.mxu0
        %v614 = vadd.f32 %v264, %v613
        %v615 = vpop.f32.mrf.mxu0
        %v616 = vadd.f32 %v260, %v615
        %v617 = vpop.f32.mrf.mxu0
        %v618 = vadd.f32 %v264, %v617
        %619 = vdwg.mxu0
        %620 = vst [vmem:[%s204] sm:$0xff] %v542
        %621 = vst [vmem:[%s204 + $0x8] sm:$0xff] %v544
        %622 = vst [vmem:[%s204 + $0x10] sm:$0xff] %v546
        %623 = vst [vmem:[%s204 + $0x18] sm:$0xff] %v548
        %624 = vst [vmem:[%s204 + $0x20] sm:$0xff] %v552
        %625 = vst [vmem:[%s204 + $0x28] sm:$0xff] %v554
        %626 = vst [vmem:[%s204 + $0x30] sm:$0xff] %v556
        %627 = vst [vmem:[%s204 + $0x38] sm:$0xff] %v558
        %628 = vst [vmem:[%s204 + $0x40] sm:$0xff] %v562
        %629 = vst [vmem:[%s204 + $0x48] sm:$0xff] %v564
        %630 = vst [vmem:[%s204 + $0x50] sm:$0xff] %v566
        %631 = vst [vmem:[%s204 + $0x58] sm:$0xff] %v568
        %632 = vst [vmem:[%s204 + $0x60] sm:$0xff] %v572
        %633 = vst [vmem:[%s204 + $0x68] sm:$0xff] %v574
        %634 = vst [vmem:[%s204 + $0x70] sm:$0xff] %v576
        %635 = vst [vmem:[%s204 + $0x78] sm:$0xff] %v578
        %636 = vst [vmem:[%s204 + $0x80] sm:$0xff] %v582
        %637 = vst [vmem:[%s204 + $0x88] sm:$0xff] %v584
        %638 = vst [vmem:[%s204 + $0x90] sm:$0xff] %v586
        %639 = vst [vmem:[%s204 + $0x98] sm:$0xff] %v588
        %640 = vst [vmem:[%s204 + $0xa0] sm:$0xff] %v592
        %641 = vst [vmem:[%s204 + $0xa8] sm:$0xff] %v594
        %642 = vst [vmem:[%s204 + $0xb0] sm:$0xff] %v596
        %643 = vst [vmem:[%s204 + $0xb8] sm:$0xff] %v598
        %644 = vst [vmem:[%s204 + $0xc0] sm:$0xff] %v602
        %645 = vst [vmem:[%s204 + $0xc8] sm:$0xff] %v604
        %646 = vst [vmem:[%s204 + $0xd0] sm:$0xff] %v606
        %647 = vst [vmem:[%s204 + $0xd8] sm:$0xff] %v608
        %648 = vst [vmem:[%s204 + $0xe0] sm:$0xff] %v612
        %649 = vst [vmem:[%s204 + $0xe8] sm:$0xff] %v614
        %650 = vst [vmem:[%s204 + $0xf0] sm:$0xff] %v616
        %651 = vst [vmem:[%s204 + $0xf8] sm:$0xff] %v618
        %s652 = sand.u32 %s97, 1
        %s653 = scalar_lea.sflag [#allocation4], %s652
        %s654 = sand.u32 %s97, 1
        %s655 = smul.addr %s654, 256
        %s656 = scalar_lea.vmem [#allocation7], %s655
        // Predicated region
        $region41: #{tpu_custom_call.1} parent=31 // pred_check
          %p657 = pneg %p107
        $region42: #{tpu_custom_call.1} parent=31 // pred_check_branch
          %659 = sbr.rel (%p657) target = $region44
        $region43: #{tpu_custom_call.1} parent=31 // pred_region
          %s660 = smul.u32 16, %s21
          %s662 = ssub.s32 4096, 4096
          %663 = vsyncadd %s653, %s662
          %s664 = smul.addr %s660, 2
          %s665 = smul.addr %s664, 128
          %s666 = scalar_lea.hbm %s3, %s665
          %s667 = sshll.u32 %s656, 4
          %s668 = int_to_ptr.vmem [resolvable:$true] %s667
          %673 = dma.vmem_to_hbm [thread:$0]  %s668, 4096, %s666, %s653, 256, 256, 16
        $region44: #{tpu_custom_call.1} parent=31 // pred_fallthru
          _
      $region32: #{tpu_custom_call.1} parent=5 // pred_fallthru
        _
      %p674 = scmp.le.s32.totalorder 2, %s16
      // Predicated region
      $region45: #{tpu_custom_call.1} parent=5 // pred_check
        %p675 = pneg %p674
      $region46: #{tpu_custom_call.1} parent=5 // pred_check_branch
        %677 = sbr.rel (%p675) target = $region48
      $region47: #{tpu_custom_call.1} parent=5 // pred_region
        %s678 = ssub.s32 %s16, 2
        // Predicated region
        $region49: #{tpu_custom_call.1} parent=47 // pred_check
          %p679 = pneg %p113
        $region50: #{tpu_custom_call.1} parent=47 // pred_check_branch
          %681 = sbr.rel (%p679) target = $region52
        $region51: #{tpu_custom_call.1} parent=47 // pred_region
          %s682 = sand.u32 %s98, 1
          %s683 = scalar_lea.sflag [#allocation4], %s682
          %s684 = sand.u32 %s98, 1
          %s685 = smul.addr %s684, 256
          %s686 = scalar_lea.vmem [#allocation7], %s685
          %687 = dma.done %s683, 4096
        $region52: #{tpu_custom_call.1} parent=47 // pred_fallthru
          _
      $region48: #{tpu_custom_call.1} parent=5 // pred_fallthru
        _
    $region6: #{tpu_custom_call.1} parent=1 // loop_footer
      %s20 = sadd.s32 1, %s16
    $region7: #{tpu_custom_call.1} parent=1 // loop_footer_branch
      %15 = sbr.rel target = $region3
    $region8: #{tpu_custom_call.1} parent=1 // loop_exit
      _
    %688 = vsyncpa [#allocation3], 1
    %s689 = scalar_lea.sflag [#allocation3], 1
    %690 = vsyncpa %s689, 1
    %691 = vsyncpa [#allocation6], 1
    %692 = vsyncpa [#allocation4], 1
    %s693 = scalar_lea.sflag [#allocation4], 1
    %694 = vsyncpa %s693, 1

// kernel: tpu_custom_call.1
$region0: #{tpu_custom_call.1}
  #allocation0 [shape = 'u32[]', space=smem, size = 0x4, offset = 0x4, fixed_abs, tag = 'smem constant byte address 0x4 - core index']
  #allocation1 [shape = 'u32[144,128]{1,0:T(1,128)}', space=vmem, size = 0x12000, scoped, tag = 'internal scratch']
  %s0 = inlined_call_operand.hbm [shape: bf16[256,256], index: 0, kind: input, shape index: {}]
  %s1 = inlined_call_operand.hbm [shape: bf16[256,256], index: 1, kind: input, shape index: {}]
  %s2 = inlined_call_operand.vmem [shape: f32[1,256], index: 2, kind: input, shape index: {}]
  %s3 = inlined_call_operand.hbm [shape: f32[256,256], index: 3, kind: output, shape index: {}]
  %s4 = sld [smem:[#allocation0]]
  $region53: #{tpu_custom_call.1} parent=0
    _
  %s6 = ssub.s32 1, %s4
  %s7 = scalar_select 0, %s6, %s4
  $region1: #{tpu_custom_call.1} parent=0
    #allocation2 [shape = 'u8[131072]{0}', space=vmem, size = 0x20000, scoped, tag = 'input window, operand 0']
    #allocation3 [shape = 's32[2]{0}', space=sflag, size = 0x8, scoped, tag = 'scoped memory for tpu_custom_call.1']
    #allocation4 [shape = 's32[2]{0}', space=sflag, size = 0x8, scoped, tag = 'scoped memory for tpu_custom_call.1']
    #allocation5 [shape = 'u8[131072]{0}', space=vmem, size = 0x20000, scoped, tag = 'input window, operand 1, single buffered']
    #allocation6 [shape = 's32[1]{0}', space=sflag, size = 0x4, scoped, tag = 'scoped memory for tpu_custom_call.1']
    #allocation7 [shape = 'u8[262144]{0}', space=vmem, size = 0x40000, scoped, tag = 'output window, operand 0']
    %8 = vsyncpa [#allocation3], 0
    %s9 = scalar_lea.sflag [#allocation3], 1
    %10 = vsyncpa %s9, 0
    %11 = vsyncpa [#allocation6], 0
    %12 = vsyncpa [#allocation4], 0
    %s13 = scalar_lea.sflag [#allocation4], 1
    %14 = vsyncpa %s13, 0
    loop: start=0, step=1, limit=4
    $region2: #{tpu_custom_call.1} parent=1 // loop_pre_header
      _
    $region3: #{tpu_custom_call.1} parent=1 // loop_header
      %s16 = sphi 0, %s20
      %p17 = scmp.ge.s32.totalorder %s16, 4
      %s26 = sphi 0, %s28
      %s29 = sphi 0, %s26
      %s30 = sphi 0, %s29
      %s46 = sphi 0, %s30
      %s50 = sphi 0, %s50
      %s52 = sphi 0, %s50
      %s53 = sphi 0, %s52
      %s67 = sphi 0, %s53
      %s71 = sphi 0, %s71
      %s73 = sphi 0, %s71
      %s74 = sphi 0, %s73
      %s88 = sphi 0, %s74
      %s94 = sphi 0, %s96
      %s97 = sphi 0, %s94
      %s98 = sphi 0, %s97
      %s114 = sphi 0, %s98
    $region4: #{tpu_custom_call.1} parent=1 // loop_header_branch
      %19 = sbr.rel (%p17) target = $region8
    $region5: #{tpu_custom_call.1} parent=1 // loop_body
      %s21 = ssub.s32 %s16, 1
      %s22 = ssub.s32 %s16, 2
      %s23 = sadd.s32 %s16, 1
      %s24 = ssub.s32 %s16, %s23
      %p25 = scmp.eq.s32.totalorder %s24, 0
      %s27 = sadd.s32 %s26, 1
      %s28 = scalar_select %p25, %s26, %s27
      %p31 = pneg %p25
      %p32 = scmp.eq.s32.totalorder %s16, 1
      %p33 = por %p31, %p32
      %p34 = scmp.ne.s32.totalorder %s26, %s29
      %p35 = scmp.eq.s32.totalorder %s16, 0
      %p36 = por %p34, %p35
      %p37 = scmp.ne.s32.totalorder %s26, %s29
      %p38 = scmp.eq.s32.totalorder %s21, 1
      %p39 = por %p37, %p38
      %p40 = scmp.ne.s32.totalorder %s29, %s30
      %p41 = scmp.eq.s32.totalorder %s21, 0
      %p42 = por %p40, %p41
      %p43 = scmp.ne.s32.totalorder %s29, %s30
      %p44 = scmp.eq.s32.totalorder %s22, 1
      %p45 = por %p43, %p44
      %p47 = scmp.ne.s32.totalorder %s30, %s46
      %p48 = scmp.eq.s32.totalorder %s22, 0
      %p49 = por %p47, %p48
      %s51 = sadd.s32 %s50, 1
      %p54 = scmp.eq.s32.totalorder %s16, 1
      %p55 = scmp.ne.s32.totalorder %s50, %s52
      %p56 = scmp.eq.s32.totalorder %s16, 0
      %p57 = por %p55, %p56
      %p58 = scmp.ne.s32.totalorder %s50, %s52
      %p59 = scmp.eq.s32.totalorder %s21, 1
      %p60 = por %p58, %p59
      %p61 = scmp.ne.s32.totalorder %s52, %s53
      %p62 = scmp.eq.s32.totalorder %s21, 0
      %p63 = por %p61, %p62
      %p64 = scmp.ne.s32.totalorder %s52, %s53
      %p65 = scmp.eq.s32.totalorder %s22, 1
      %p66 = por %p64, %p65
      %p68 = scmp.ne.s32.totalorder %s53, %s67
      %p69 = scmp.eq.s32.totalorder %s22, 0
      %p70 = por %p68, %p69
      %s72 = sadd.s32 %s71, 1
      %p75 = scmp.eq.s32.totalorder %s16, 1
      %p76 = scmp.ne.s32.totalorder %s71, %s73
      %p77 = scmp.eq.s32.totalorder %s16, 0
      %p78 = por %p76, %p77
      %p79 = scmp.ne.s32.totalorder %s71, %s73
      %p80 = scmp.eq.s32.totalorder %s21, 1
      %p81 = por %p79, %p80
      %p82 = scmp.ne.s32.totalorder %s73, %s74
      %p83 = scmp.eq.s32.totalorder %s21, 0
      %p84 = por %p82, %p83
      %p85 = scmp.ne.s32.totalorder %s73, %s74
      %p86 = scmp.eq.s32.totalorder %s22, 1
      %p87 = por %p85, %p86
      %p89 = scmp.ne.s32.totalorder %s74, %s88
      %p90 = scmp.eq.s32.totalorder %s22, 0
      %p91 = por %p89, %p90
      %s92 = ssub.s32 %s16, %s23
      %p93 = scmp.eq.s32.totalorder %s92, 0
      %s95 = sadd.s32 %s94, 1
      %s96 = scalar_select %p93, %s94, %s95
      %p99 = pneg %p93
      %p100 = scmp.eq.s32.totalorder %s16, 1
      %p101 = por %p99, %p100
      %p102 = scmp.ne.s32.totalorder %s94, %s97
      %p103 = scmp.eq.s32.totalorder %s16, 0
      %p104 = por %p102, %p103
      %p105 = scmp.ne.s32.totalorder %s94, %s97
      %p106 = scmp.eq.s32.totalorder %s21, 1
      %p107 = por %p105, %p106
      %p108 = scmp.ne.s32.totalorder %s97, %s98
      %p109 = scmp.eq.s32.totalorder %s21, 0
      %p110 = por %p108, %p109
      %p111 = scmp.ne.s32.totalorder %s97, %s98
      %p112 = scmp.eq.s32.totalorder %s22, 1
      %p113 = por %p111, %p112
      %p115 = scmp.ne.s32.totalorder %s98, %s114
      %p116 = scmp.eq.s32.totalorder %s22, 0
      %p117 = por %p115, %p116
      %p118 = scmp.le.s32.totalorder 1, %s16
      %p119 = scmp.lt.s32.totalorder %s16, 3
      %p120 = pnand %p118, %p119
      %p121 = pneg %p120
      // Predicated region
      $region9: #{tpu_custom_call.1} parent=5 // pred_check
        _
      $region10: #{tpu_custom_call.1} parent=5 // pred_check_branch
        %123 = sbr.rel (%p120) target = $region12
      $region11: #{tpu_custom_call.1} parent=5 // pred_region
        %s124 = ssub.s32 %s16, 1
        // Predicated region
        $region13: #{tpu_custom_call.1} parent=11 // pred_check
          %p125 = pneg %p63
        $region14: #{tpu_custom_call.1} parent=11 // pred_check_branch
          %127 = sbr.rel (%p125) target = $region16
        $region15: #{tpu_custom_call.1} parent=11 // pred_region
          %s129 = ssub.s32 4096, 4096
          %130 = vsyncadd [#allocation6], %s129
          %s131 = sshll.u32 [#allocation5], 4
          %s132 = int_to_ptr.vmem [resolvable:$true] %s131
          %137 = dma.hbm_to_vmem [thread:$0]  %s1, 4096, %s132, [#allocation6], 128, 128, 8
        $region16: #{tpu_custom_call.1} parent=11 // pred_fallthru
          _
        // Predicated region
        $region17: #{tpu_custom_call.1} parent=11 // pred_check
          %p138 = pneg %p84
        $region18: #{tpu_custom_call.1} parent=11 // pred_check_branch
          %140 = sbr.rel (%p138) target = $region20
        $region19: #{tpu_custom_call.1} parent=11 // pred_region
          _
        $region20: #{tpu_custom_call.1} parent=11 // pred_fallthru
          _
      $region12: #{tpu_custom_call.1} parent=5 // pred_fallthru
        _
      %p141 = scmp.lt.s32.totalorder %s16, 2
      // Predicated region
      $region21: #{tpu_custom_call.1} parent=5 // pred_check
        %p142 = pneg %p141
      $region22: #{tpu_custom_call.1} parent=5 // pred_check_branch
        %144 = sbr.rel (%p142) target = $region24
      $region23: #{tpu_custom_call.1} parent=5 // pred_region
        // Predicated region
        $region25: #{tpu_custom_call.1} parent=23 // pred_check
          %p145 = pneg %p36
        $region26: #{tpu_custom_call.1} parent=23 // pred_check_branch
          %147 = sbr.rel (%p145) target = $region28
        $region27: #{tpu_custom_call.1} parent=23 // pred_region
          %s148 = sand.u32 %s26, 1
          %s149 = scalar_lea.sflag [#allocation3], %s148
          %s150 = sand.u32 %s26, 1
          %s151 = smul.addr %s150, 128
          %s152 = scalar_lea.vmem [#allocation2], %s151
          %s153 = smul.u32 16, %s16
          %s155 = ssub.s32 2048, 2048
          %156 = vsyncadd %s149, %s155
          %s157 = smul.addr %s153, 2
          %s158 = smul.addr %s157, 64
          %s159 = scalar_lea.hbm %s0, %s158
          %s160 = sshll.u32 %s152, 4
          %s161 = int_to_ptr.vmem [resolvable:$true] %s160
          %166 = dma.hbm_to_vmem [thread:$0]  %s159, 2048, %s161, %s149, 128, 128, 8
        $region28: #{tpu_custom_call.1} parent=23 // pred_fallthru
          _
      $region24: #{tpu_custom_call.1} parent=5 // pred_fallthru
        _
      %p167 = scmp.le.s32.totalorder 1, %s16
      %p168 = scmp.lt.s32.totalorder %s16, 3
      %p169 = pnand %p167, %p168
      %p170 = pneg %p169
      // Predicated region
      $region29: #{tpu_custom_call.1} parent=5 // pred_check
        _
      $region30: #{tpu_custom_call.1} parent=5 // pred_check_branch
        %172 = sbr.rel (%p169) target = $region32
      $region31: #{tpu_custom_call.1} parent=5 // pred_region
        %s173 = ssub.s32 %s16, 1
        %s174 = sand.u32 %s29, 1
        %s175 = scalar_lea.sflag [#allocation3], %s174
        %s176 = sand.u32 %s29, 1
        %s177 = smul.addr %s176, 128
        %s178 = scalar_lea.vmem [#allocation2], %s177
        // Predicated region
        $region33: #{tpu_custom_call.1} parent=31 // pred_check
          %p179 = pneg %p42
        $region34: #{tpu_custom_call.1} parent=31 // pred_check_branch
          %181 = sbr.rel (%p179) target = $region36
        $region35: #{tpu_custom_call.1} parent=31 // pred_region
          %182 = dma.done %s175, 2048
        $region36: #{tpu_custom_call.1} parent=31 // pred_fallthru
          _
        // Predicated region
        $region37: #{tpu_custom_call.1} parent=31 // pred_check
          %p183 = pneg %p63
        $region38: #{tpu_custom_call.1} parent=31 // pred_check_branch
          %185 = sbr.rel (%p183) target = $region40
        $region39: #{tpu_custom_call.1} parent=31 // pred_region
          %186 = dma.done [#allocation6], 4096
        $region40: #{tpu_custom_call.1} parent=31 // pred_fallthru
          _
        %s187 = sand.u32 %s29, 1
        %s188 = scalar_lea.sflag [#allocation3], %s187
        %s189 = sand.u32 %s29, 1
        %s190 = smul.addr %s189, 128
        %s191 = scalar_lea.vmem [#allocation2], %s190
        %p192 = pneg %p42
        %p193 = pneg %p39
        %p194 = pneg %p63
        %p195 = pneg %p60
        %p196 = pneg %p84
        %p197 = pneg %p81
        %p198 = pneg %p110
        %p199 = pneg %p107
        %s200 = sand.u32 %s97, 1
        %s201 = scalar_lea.sflag [#allocation4], %s200
        %s202 = sand.u32 %s97, 1
        %s203 = smul.addr %s202, 256
        %s204 = scalar_lea.vmem [#allocation7], %s203
        %s205 = smul.u32 16, %s21
        %s206 = smul.u32 16, %s21
        %v207 = vld [vmem:[%s178] sm:$0xff]
        %v208 = vld [vmem:[%s178 + $0x8] sm:$0xff]
        %v209 = vld [vmem:[%s178 + $0x10] sm:$0xff]
        %v210 = vld [vmem:[%s178 + $0x18] sm:$0xff]
        %v211 = vld [vmem:[%s178 + $0x20] sm:$0xff]
        %v212 = vld [vmem:[%s178 + $0x28] sm:$0xff]
        %v213 = vld [vmem:[%s178 + $0x30] sm:$0xff]
        %v214 = vld [vmem:[%s178 + $0x38] sm:$0xff]
        %v215 = vld [vmem:[%s178 + $0x40] sm:$0xff]
        %v216 = vld [vmem:[%s178 + $0x48] sm:$0xff]
        %v217 = vld [vmem:[%s178 + $0x50] sm:$0xff]
        %v218 = vld [vmem:[%s178 + $0x58] sm:$0xff]
        %v219 = vld [vmem:[%s178 + $0x60] sm:$0xff]
        %v220 = vld [vmem:[%s178 + $0x68] sm:$0xff]
        %v221 = vld [vmem:[%s178 + $0x70] sm:$0xff]
        %v222 = vld [vmem:[%s178 + $0x78] sm:$0xff]
        %v223 = vld [vmem:[#allocation5] sm:$0xff]
        %v224 = vld [vmem:[#allocation5 + $0x8] sm:$0xff]
        %v225 = vld [vmem:[#allocation5 + $0x10] sm:$0xff]
        %v226 = vld [vmem:[#allocation5 + $0x18] sm:$0xff]
        %v227 = vld [vmem:[#allocation5 + $0x20] sm:$0xff]
        %v228 = vld [vmem:[#allocation5 + $0x28] sm:$0xff]
        %v229 = vld [vmem:[#allocation5 + $0x30] sm:$0xff]
        %v230 = vld [vmem:[#allocation5 + $0x38] sm:$0xff]
        %v231 = vld [vmem:[#allocation5 + $0x40] sm:$0xff]
        %v232 = vld [vmem:[#allocation5 + $0x48] sm:$0xff]
        %v233 = vld [vmem:[#allocation5 + $0x50] sm:$0xff]
        %v234 = vld [vmem:[#allocation5 + $0x58] sm:$0xff]
        %v235 = vld [vmem:[#allocation5 + $0x60] sm:$0xff]
        %v236 = vld [vmem:[#allocation5 + $0x68] sm:$0xff]
        %v237 = vld [vmem:[#allocation5 + $0x70] sm:$0xff]
        %v238 = vld [vmem:[#allocation5 + $0x78] sm:$0xff]
        %v239 = vld [vmem:[#allocation5 + $0x80] sm:$0xff]
        %v240 = vld [vmem:[#allocation5 + $0x88] sm:$0xff]
        %v241 = vld [vmem:[#allocation5 + $0x90] sm:$0xff]
        %v242 = vld [vmem:[#allocation5 + $0x98] sm:$0xff]
        %v243 = vld [vmem:[#allocation5 + $0xa0] sm:$0xff]
        %v244 = vld [vmem:[#allocation5 + $0xa8] sm:$0xff]
        %v245 = vld [vmem:[#allocation5 + $0xb0] sm:$0xff]
        %v246 = vld [vmem:[#allocation5 + $0xb8] sm:$0xff]
        %v247 = vld [vmem:[#allocation5 + $0xc0] sm:$0xff]
        %v248 = vld [vmem:[#allocation5 + $0xc8] sm:$0xff]
        %v249 = vld [vmem:[#allocation5 + $0xd0] sm:$0xff]
        %v250 = vld [vmem:[#allocation5 + $0xd8] sm:$0xff]
        %v251 = vld [vmem:[#allocation5 + $0xe0] sm:$0xff]
        %v252 = vld [vmem:[#allocation5 + $0xe8] sm:$0xff]
        %v253 = vld [vmem:[#allocation5 + $0xf0] sm:$0xff]
        %v254 = vld [vmem:[#allocation5 + $0xf8] sm:$0xff]
        %v255 = vld [vmem:[%s2] sm:$0x3]
        %v257 = vlaneseq
        %v258 = vshrl.u32 %v257, 7
        %v259 = vsub.s32 0, %v258
        %v260 = vrot.slane %v255, %v259
        %v261 = vlaneseq
        %v262 = vshrl.u32 %v261, 7
        %v263 = vsub.s32 1, %v262
        %v264 = vrot.slane %v255, %v263
        %v283 = vunpack.c.l.b16 %v207
        %v284 = vunpack.c.h.b16 %v207
        %v285 = vunpack.c.l.b16 %v208
        %v286 = vunpack.c.h.b16 %v208
        %v287 = vunpack.c.l.b16 %v209
        %v288 = vunpack.c.h.b16 %v209
        %v289 = vunpack.c.l.b16 %v210
        %v290 = vunpack.c.h.b16 %v210
        %v291 = vunpack.c.l.b16 %v211
        %v292 = vunpack.c.h.b16 %v211
        %v293 = vunpack.c.l.b16 %v212
        %v294 = vunpack.c.h.b16 %v212
        %v295 = vunpack.c.l.b16 %v213
        %v296 = vunpack.c.h.b16 %v213
        %v297 = vunpack.c.l.b16 %v214
        %v298 = vunpack.c.h.b16 %v214
        %v299 = vunpack.c.l.b16 %v215
        %v300 = vunpack.c.h.b16 %v215
        %v301 = vunpack.c.l.b16 %v216
        %v302 = vunpack.c.h.b16 %v216
        %v303 = vunpack.c.l.b16 %v217
        %v304 = vunpack.c.h.b16 %v217
        %v305 = vunpack.c.l.b16 %v218
        %v306 = vunpack.c.h.b16 %v218
        %v307 = vunpack.c.l.b16 %v219
        %v308 = vunpack.c.h.b16 %v219
        %v309 = vunpack.c.l.b16 %v220
        %v310 = vunpack.c.h.b16 %v220
        %v311 = vunpack.c.l.b16 %v221
        %v312 = vunpack.c.h.b16 %v221
        %v313 = vunpack.c.l.b16 %v222
        %v314 = vunpack.c.h.b16 %v222
        %v315 = vpack.c.b16 %v285, %v283
        %v316 = vpack.c.b16 %v286, %v284
        %v317 = vpack.c.b16 %v289, %v287
        %v318 = vpack.c.b16 %v290, %v288
        %v319 = vpack.c.b16 %v293, %v291
        %v320 = vpack.c.b16 %v294, %v292
        %v321 = vpack.c.b16 %v297, %v295
        %v322 = vpack.c.b16 %v298, %v296
        %v323 = vpack.c.b16 %v301, %v299
        %v324 = vpack.c.b16 %v302, %v300
        %v325 = vpack.c.b16 %v305, %v303
        %v326 = vpack.c.b16 %v306, %v304
        %v327 = vpack.c.b16 %v309, %v307
        %v328 = vpack.c.b16 %v310, %v308
        %v329 = vpack.c.b16 %v313, %v311
        %v330 = vpack.c.b16 %v314, %v312
        %v379 = vunpack.c.l.b16 %v223
        %v380 = vunpack.c.h.b16 %v223
        %v381 = vunpack.c.l.b16 %v224
        %v382 = vunpack.c.h.b16 %v224
        %v383 = vunpack.c.l.b16 %v225
        %v384 = vunpack.c.h.b16 %v225
        %v385 = vunpack.c.l.b16 %v226
        %v386 = vunpack.c.h.b16 %v226
        %v387 = vunpack.c.l.b16 %v227
        %v388 = vunpack.c.h.b16 %v227
        %v389 = vunpack.c.l.b16 %v228
        %v390 = vunpack.c.h.b16 %v228
        %v391 = vunpack.c.l.b16 %v229
        %v392 = vunpack.c.h.b16 %v229
        %v393 = vunpack.c.l.b16 %v230
        %v394 = vunpack.c.h.b16 %v230
        %v395 = vunpack.c.l.b16 %v231
        %v396 = vunpack.c.h.b16 %v231
        %v397 = vunpack.c.l.b16 %v232
        %v398 = vunpack.c.h.b16 %v232
        %v399 = vunpack.c.l.b16 %v233
        %v400 = vunpack.c.h.b16 %v233
        %v401 = vunpack.c.l.b16 %v234
        %v402 = vunpack.c.h.b16 %v234
        %v403 = vunpack.c.l.b16 %v235
        %v404 = vunpack.c.h.b16 %v235
        %v405 = vunpack.c.l.b16 %v236
        %v406 = vunpack.c.h.b16 %v236
        %v407 = vunpack.c.l.b16 %v237
        %v408 = vunpack.c.h.b16 %v237
        %v409 = vunpack.c.l.b16 %v238
        %v410 = vunpack.c.h.b16 %v238
        %v411 = vunpack.c.l.b16 %v239
        %v412 = vunpack.c.h.b16 %v239
        %v413 = vunpack.c.l.b16 %v240
        %v414 = vunpack.c.h.b16 %v240
        %v415 = vunpack.c.l.b16 %v241
        %v416 = vunpack.c.h.b16 %v241
        %v417 = vunpack.c.l.b16 %v242
        %v418 = vunpack.c.h.b16 %v242
        %v419 = vunpack.c.l.b16 %v243
        %v420 = vunpack.c.h.b16 %v243
        %v421 = vunpack.c.l.b16 %v244
        %v422 = vunpack.c.h.b16 %v244
        %v423 = vunpack.c.l.b16 %v245
        %v424 = vunpack.c.h.b16 %v245
        %v425 = vunpack.c.l.b16 %v246
        %v426 = vunpack.c.h.b16 %v246
        %v427 = vunpack.c.l.b16 %v247
        %v428 = vunpack.c.h.b16 %v247
        %v429 = vunpack.c.l.b16 %v248
        %v430 = vunpack.c.h.b16 %v248
        %v431 = vunpack.c.l.b16 %v249
        %v432 = vunpack.c.h.b16 %v249
        %v433 = vunpack.c.l.b16 %v250
        %v434 = vunpack.c.h.b16 %v250
        %v435 = vunpack.c.l.b16 %v251
        %v436 = vunpack.c.h.b16 %v251
        %v437 = vunpack.c.l.b16 %v252
        %v438 = vunpack.c.h.b16 %v252
        %v439 = vunpack.c.l.b16 %v253
        %v440 = vunpack.c.h.b16 %v253
        %v441 = vunpack.c.l.b16 %v254
        %v442 = vunpack.c.h.b16 %v254
        %v443 = vpack.c.b16 %v381, %v379
        %v444 = vpack.c.b16 %v382, %v380
        %v445 = vpack.c.b16 %v385, %v383
        %v446 = vpack.c.b16 %v386, %v384
        %v447 = vpack.c.b16 %v389, %v387
        %v448 = vpack.c.b16 %v390, %v388
        %v449 = vpack.c.b16 %v393, %v391
        %v450 = vpack.c.b16 %v394, %v392
        %v451 = vpack.c.b16 %v397, %v395
        %v452 = vpack.c.b16 %v398, %v396
        %v453 = vpack.c.b16 %v401, %v399
        %v454 = vpack.c.b16 %v402, %v400
        %v455 = vpack.c.b16 %v405, %v403
        %v456 = vpack.c.b16 %v406, %v404
        %v457 = vpack.c.b16 %v409, %v407
        %v458 = vpack.c.b16 %v410, %v408
        %v459 = vpack.c.b16 %v413, %v411
        %v460 = vpack.c.b16 %v414, %v412
        %v461 = vpack.c.b16 %v417, %v415
        %v462 = vpack.c.b16 %v418, %v416
        %v463 = vpack.c.b16 %v421, %v419
        %v464 = vpack.c.b16 %v422, %v420
        %v465 = vpack.c.b16 %v425, %v423
        %v466 = vpack.c.b16 %v426, %v424
        %v467 = vpack.c.b16 %v429, %v427
        %v468 = vpack.c.b16 %v430, %v428
        %v469 = vpack.c.b16 %v433, %v431
        %v470 = vpack.c.b16 %v434, %v432
        %v471 = vpack.c.b16 %v437, %v435
        %v472 = vpack.c.b16 %v438, %v436
        %v473 = vpack.c.b16 %v441, %v439
        %v474 = vpack.c.b16 %v442, %v440
        %507 = vmatprep.subr.bf16.mxu0 %v458
        %508 = vmatpush1.bf16.msra.mxu0 %v457
        %509 = vmatprep.subr.bf16.mxu0 %v456
        %510 = vmatpush1.bf16.msra.mxu0 %v455
        %511 = vmatprep.subr.bf16.mxu0 %v454
        %512 = vmatpush1.bf16.msra.mxu0 %v453
        %513 = vmatprep.subr.bf16.mxu0 %v452
        %514 = vmatpush1.bf16.msra.mxu0 %v451
        %515 = vmatprep.subr.bf16.mxu0 %v450
        %516 = vmatpush1.bf16.msra.mxu0 %v449
        %517 = vmatprep.subr.bf16.mxu0 %v448
        %518 = vmatpush1.bf16.msra.mxu0 %v447
        %519 = vmatprep.subr.bf16.mxu0 %v446
        %520 = vmatpush1.bf16.msra.mxu0 %v445
        %521 = vmatprep.subr.bf16.mxu0 %v444
        %522 = vmatpush1.bf16.msra.mxu0 %v443
        %523 = vmatprep.subr.bf16.mxu0 %v474
        %524 = vmatpush2.bf16.msra.mxu0 %v473
        %525 = vmatprep.subr.bf16.mxu0 %v472
        %526 = vmatpush2.bf16.msra.mxu0 %v471
        %527 = vmatprep.subr.bf16.mxu0 %v470
        %528 = vmatpush2.bf16.msra.mxu0 %v469
        %529 = vmatprep.subr.bf16.mxu0 %v468
        %530 = vmatpush2.bf16.msra.mxu0 %v467
        %531 = vmatprep.subr.bf16.mxu0 %v466
        %532 = vmatpush2.bf16.msra.mxu0 %v465
        %533 = vmatprep.subr.bf16.mxu0 %v464
        %534 = vmatpush2.bf16.msra.mxu0 %v463
        %535 = vmatprep.subr.bf16.mxu0 %v462
        %536 = vmatpush2.bf16.msra.mxu0 %v461
        %537 = vmatprep.subr.bf16.mxu0 %v460
        %538 = vmatpush2.bf16.msra.mxu0 %v459
        %539 = vmatprep.mubr.bf16.mxu0 %v316
        %540 = vmatmul.mubr.bf16.gmra.mxu0 %v315
        %v541 = vpop.f32.mrf.mxu0
        %v542 = vadd.f32 %v260, %v541
        %v543 = vpop.f32.mrf.mxu0
        %v544 = vadd.f32 %v264, %v543
        %v545 = vpop.f32.mrf.mxu0
        %v546 = vadd.f32 %v260, %v545
        %v547 = vpop.f32.mrf.mxu0
        %v548 = vadd.f32 %v264, %v547
        %549 = vmatprep.mubr.bf16.mxu0 %v318
        %550 = vmatmul.mubr.bf16.gmra.mxu0 %v317
        %v551 = vpop.f32.mrf.mxu0
        %v552 = vadd.f32 %v260, %v551
        %v553 = vpop.f32.mrf.mxu0
        %v554 = vadd.f32 %v264, %v553
        %v555 = vpop.f32.mrf.mxu0
        %v556 = vadd.f32 %v260, %v555
        %v557 = vpop.f32.mrf.mxu0
        %v558 = vadd.f32 %v264, %v557
        %559 = vmatprep.mubr.bf16.mxu0 %v320
        %560 = vmatmul.mubr.bf16.gmra.mxu0 %v319
        %v561 = vpop.f32.mrf.mxu0
        %v562 = vadd.f32 %v260, %v561
        %v563 = vpop.f32.mrf.mxu0
        %v564 = vadd.f32 %v264, %v563
        %v565 = vpop.f32.mrf.mxu0
        %v566 = vadd.f32 %v260, %v565
        %v567 = vpop.f32.mrf.mxu0
        %v568 = vadd.f32 %v264, %v567
        %569 = vmatprep.mubr.bf16.mxu0 %v322
        %570 = vmatmul.mubr.bf16.gmra.mxu0 %v321
        %v571 = vpop.f32.mrf.mxu0
        %v572 = vadd.f32 %v260, %v571
        %v573 = vpop.f32.mrf.mxu0
        %v574 = vadd.f32 %v264, %v573
        %v575 = vpop.f32.mrf.mxu0
        %v576 = vadd.f32 %v260, %v575
        %v577 = vpop.f32.mrf.mxu0
        %v578 = vadd.f32 %v264, %v577
        %579 = vmatprep.mubr.bf16.mxu0 %v324
        %580 = vmatmul.mubr.bf16.gmra.mxu0 %v323
        %v581 = vpop.f32.mrf.mxu0
        %v582 = vadd.f32 %v260, %v581
        %v583 = vpop.f32.mrf.mxu0
        %v584 = vadd.f32 %v264, %v583
        %v585 = vpop.f32.mrf.mxu0
        %v586 = vadd.f32 %v260, %v585
        %v587 = vpop.f32.mrf.mxu0
        %v588 = vadd.f32 %v264, %v587
        %589 = vmatprep.mubr.bf16.mxu0 %v326
        %590 = vmatmul.mubr.bf16.gmra.mxu0 %v325
        %v591 = vpop.f32.mrf.mxu0
        %v592 = vadd.f32 %v260, %v591
        %v593 = vpop.f32.mrf.mxu0
        %v594 = vadd.f32 %v264, %v593
        %v595 = vpop.f32.mrf.mxu0
        %v596 = vadd.f32 %v260, %v595
        %v597 = vpop.f32.mrf.mxu0
        %v598 = vadd.f32 %v264, %v597
        %599 = vmatprep.mubr.bf16.mxu0 %v328
        %600 = vmatmul.mubr.bf16.gmra.mxu0 %v327
        %v601 = vpop.f32.mrf.mxu0
        %v602 = vadd.f32 %v260, %v601
        %v603 = vpop.f32.mrf.mxu0
        %v604 = vadd.f32 %v264, %v603
        %v605 = vpop.f32.mrf.mxu0
        %v606 = vadd.f32 %v260, %v605
        %v607 = vpop.f32.mrf.mxu0
        %v608 = vadd.f32 %v264, %v607
        %609 = vmatprep.mubr.bf16.mxu0 %v330
        %610 = vmatmul.mubr.bf16.gmra.mxu0 %v329
        %v611 = vpop.f32.mrf.mxu0
        %v612 = vadd.f32 %v260, %v611
        %v613 = vpop.f32.mrf.mxu0
        %v614 = vadd.f32 %v264, %v613
        %v615 = vpop.f32.mrf.mxu0
        %v616 = vadd.f32 %v260, %v615
        %v617 = vpop.f32.mrf.mxu0
        %v618 = vadd.f32 %v264, %v617
        %619 = vdwg.mxu0
        %620 = vst [vmem:[%s204] sm:$0xff] %v542
        %621 = vst [vmem:[%s204 + $0x8] sm:$0xff] %v544
        %622 = vst [vmem:[%s204 + $0x10] sm:$0xff] %v546
        %623 = vst [vmem:[%s204 + $0x18] sm:$0xff] %v548
        %624 = vst [vmem:[%s204 + $0x20] sm:$0xff] %v552
        %625 = vst [vmem:[%s204 + $0x28] sm:$0xff] %v554
        %626 = vst [vmem:[%s204 + $0x30] sm:$0xff] %v556
        %627 = vst [vmem:[%s204 + $0x38] sm:$0xff] %v558
        %628 = vst [vmem:[%s204 + $0x40] sm:$0xff] %v562
        %629 = vst [vmem:[%s204 + $0x48] sm:$0xff] %v564
        %630 = vst [vmem:[%s204 + $0x50] sm:$0xff] %v566
        %631 = vst [vmem:[%s204 + $0x58] sm:$0xff] %v568
        %632 = vst [vmem:[%s204 + $0x60] sm:$0xff] %v572
        %633 = vst [vmem:[%s204 + $0x68] sm:$0xff] %v574
        %634 = vst [vmem:[%s204 + $0x70] sm:$0xff] %v576
        %635 = vst [vmem:[%s204 + $0x78] sm:$0xff] %v578
        %636 = vst [vmem:[%s204 + $0x80] sm:$0xff] %v582
        %637 = vst [vmem:[%s204 + $0x88] sm:$0xff] %v584
        %638 = vst [vmem:[%s204 + $0x90] sm:$0xff] %v586
        %639 = vst [vmem:[%s204 + $0x98] sm:$0xff] %v588
        %640 = vst [vmem:[%s204 + $0xa0] sm:$0xff] %v592
        %641 = vst [vmem:[%s204 + $0xa8] sm:$0xff] %v594
        %642 = vst [vmem:[%s204 + $0xb0] sm:$0xff] %v596
        %643 = vst [vmem:[%s204 + $0xb8] sm:$0xff] %v598
        %644 = vst [vmem:[%s204 + $0xc0] sm:$0xff] %v602
        %645 = vst [vmem:[%s204 + $0xc8] sm:$0xff] %v604
        %646 = vst [vmem:[%s204 + $0xd0] sm:$0xff] %v606
        %647 = vst [vmem:[%s204 + $0xd8] sm:$0xff] %v608
        %648 = vst [vmem:[%s204 + $0xe0] sm:$0xff] %v612
        %649 = vst [vmem:[%s204 + $0xe8] sm:$0xff] %v614
        %650 = vst [vmem:[%s204 + $0xf0] sm:$0xff] %v616
        %651 = vst [vmem:[%s204 + $0xf8] sm:$0xff] %v618
        %s652 = sand.u32 %s97, 1
        %s653 = scalar_lea.sflag [#allocation4], %s652
        %s654 = sand.u32 %s97, 1
        %s655 = smul.addr %s654, 256
        %s656 = scalar_lea.vmem [#allocation7], %s655
        // Predicated region
        $region41: #{tpu_custom_call.1} parent=31 // pred_check
          %p657 = pneg %p107
        $region42: #{tpu_custom_call.1} parent=31 // pred_check_branch
          %659 = sbr.rel (%p657) target = $region44
        $region43: #{tpu_custom_call.1} parent=31 // pred_region
          %s660 = smul.u32 16, %s21
          %s662 = ssub.s32 4096, 4096
          %663 = vsyncadd %s653, %s662
          %s664 = smul.addr %s660, 2
          %s665 = smul.addr %s664, 128
          %s666 = scalar_lea.hbm %s3, %s665
          %s667 = sshll.u32 %s656, 4
          %s668 = int_to_ptr.vmem [resolvable:$true] %s667
          %673 = dma.vmem_to_hbm [thread:$0]  %s668, 4096, %s666, %s653, 256, 256, 16
        $region44: #{tpu_custom_call.1} parent=31 // pred_fallthru
          _
      $region32: #{tpu_custom_call.1} parent=5 // pred_fallthru
        _
      %p674 = scmp.le.s32.totalorder 2, %s16
      // Predicated region
      $region45: #{tpu_custom_call.1} parent=5 // pred_check
        %p675 = pneg %p674
      $region46: #{tpu_custom_call.1} parent=5 // pred_check_branch
        %677 = sbr.rel (%p675) target = $region48
      $region47: #{tpu_custom_call.1} parent=5 // pred_region
        %s678 = ssub.s32 %s16, 2
        // Predicated region
        $region49: #{tpu_custom_call.1} parent=47 // pred_check
          %p679 = pneg %p113
        $region50: #{tpu_custom_call.1} parent=47 // pred_check_branch
          %681 = sbr.rel (%p679) target = $region52
        $region51: #{tpu_custom_call.1} parent=47 // pred_region
          %s682 = sand.u32 %s98, 1
          %s683 = scalar_lea.sflag [#allocation4], %s682
          %s684 = sand.u32 %s98, 1
          %s685 = smul.addr %s684, 256
          %s686 = scalar_lea.vmem [#allocation7], %s685
          %687 = dma.done %s683, 4096
        $region52: #{tpu_custom_call.1} parent=47 // pred_fallthru
          _
      $region48: #{tpu_custom_call.1} parent=5 // pred_fallthru
        _
    $region6: #{tpu_custom_call.1} parent=1 // loop_footer
      %s20 = sadd.s32 1, %s16
    $region7: #{tpu_custom_call.1} parent=1 // loop_footer_branch
      %15 = sbr.rel target = $region3
    $region8: #{tpu_custom_call.1} parent=1 // loop_exit
      _
    %688 = vsyncpa [#allocation3], 1
    %s689 = scalar_lea.sflag [#allocation3], 1
    %690 = vsyncpa %s689, 1
    %691 = vsyncpa [#allocation6], 1
    %692 = vsyncpa [#allocation4], 1
    %s693 = scalar_lea.sflag [#allocation4], 1
    %694 = vsyncpa %s693, 1

</llo_original>
